<compile_context>
chip_gen: v7x
topology: tpu7x:2x2x1
jax: 0.10.0
libtpu: 0.0.40
codegen_flags: <defaults>
</compile_context>

<pallas_src>
import functools

import jax
import jax.numpy as jnp
from jax.experimental import pallas as pl
from jax.experimental.pallas import tpu as pltpu


# ---------------------------------------------------------------------------
# Kernels
# ---------------------------------------------------------------------------
def _proj_logit_kernel(x_ref, g_ref, wxt_ref, wgt_ref, b_ref, wo_ref, bo_ref,
                       logit_ref):
    # x_ref: (1, Cin, ts)  g_ref: (1, Cg, ts)
    # wxt_ref: (Cint, Cin) wgt_ref: (Cint, Cg)  b_ref/wo_ref: (Cint, 1)
    # bo_ref: SMEM f32[1]  logit_ref: (1, 1, ts)
    x = x_ref[0]                                                   # (Cin, ts)
    g = g_ref[0]                                                   # (Cg,  ts)
    xi = jnp.dot(wxt_ref[...], x, preferred_element_type=jnp.float32)
    gi = jnp.dot(wgt_ref[...], g, preferred_element_type=jnp.float32)
    comb = jnp.maximum(xi + gi + b_ref[...], 0.0)                  # (Cint, ts)
    # 1-output-channel 1x1 conv as VPU mul + channel (sublane/XLU) reduce.
    logit_ref[0] = (jnp.sum(comb * wo_ref[...], axis=0, keepdims=True)
                    + bo_ref[0])                                   # (1, ts)


def _gate_apply_kernel(scal_ref, x_ref, logit_ref, out_ref):
    # scal_ref: SMEM f32[2] = [bn_scale, bn_shift]
    # x_ref: (1, Cin, ts)  logit_ref: (1, 1, ts)  out_ref: (1, Cin, ts)
    att = jax.nn.sigmoid(logit_ref[0] * scal_ref[0] + scal_ref[1])  # (1, ts)
    out_ref[0] = (x_ref[0] * att).astype(out_ref.dtype)


# ---------------------------------------------------------------------------
# Wrapper
# ---------------------------------------------------------------------------
@functools.partial(jax.jit, static_argnames=("eps", "tile_cols"))
def attention_block_forward(x_nchw, gate_nchw, params, eps=1e-5,
                            tile_cols=1024):
    """Pallas implementation of AttentionBlock.forward(x, gate). NCHW in/out."""
    Wg, bg, Wx, bx, Wo, bo, gamma, beta = params
    B, Cin, H, W = x_nchw.shape
    Bg, Cg, Hg, Wgsp = gate_nchw.shape

    if (Hg, Wgsp) != (H, W):
        # Bilinear interpolation (align_corners=False) commutes with the 1x1
        # gate conv (pointwise linear map, interp weights sum to 1), so resize
        # the raw gate here and keep the conv inside the kernel.
        gate_nchw = jax.image.resize(gate_nchw, (Bg, Cg, H, W),
                                     method="bilinear")

    HW = H * W
    # Lane-dense spatial tile: multiple of 128, ~1024 cols (sweepable).
    ts = min(tile_cols, ((HW + 127) // 128) * 128)
    nt = pl.cdiv(HW, ts)
    HWp = nt * ts
    pad = HWp - HW

    f32 = jnp.float32
    xr = x_nchw.reshape(B, Cin, HW)
    gr = gate_nchw.reshape(B, Cg, HW)
    if pad:
        xr = jnp.pad(xr, ((0, 0), (0, 0), (0, pad)))
        gr = jnp.pad(gr, ((0, 0), (0, 0), (0, pad)))

    Wxt = Wx.T.astype(f32)                       # (Cint, Cin)
    Wgt = Wg.T.astype(f32)                       # (Cint, Cg)
    Cint = Wxt.shape[0]
    b2 = (bx + bg).astype(f32).reshape(Cint, 1)  # pre-added biases
    Wo2 = Wo.astype(f32).reshape(Cint, 1)
    bo1 = bo.astype(f32).reshape(1)

    itemsize = jnp.dtype(x_nchw.dtype).itemsize
    Mp = B * HWp

    # Modest explicit VMEM budget: fits every generation incl. v7x (64 MiB).
    cparams = pltpu.CompilerParams(
        dimension_semantics=("parallel", "parallel"),
        vmem_limit_bytes=32 * 1024 * 1024,
    )

    # ---------------- pass 1: projections + ReLU + 1-channel logit ----------
    cost1 = pl.CostEstimate(
        flops=2 * Mp * (Cin + Cg) * Cint + 4 * Mp * Cint,
        transcendentals=0,
        bytes_accessed=itemsize * Mp * (Cin + Cg) + 4 * Mp,
    )
    logits = pl.pallas_call(
        _proj_logit_kernel,
        out_shape=jax.ShapeDtypeStruct((B, 1, HWp), f32),
        grid=(B, nt),
        in_specs=[
            pl.BlockSpec((1, Cin, ts), lambda b, s: (b, 0, s)),
            pl.BlockSpec((1, Cg, ts), lambda b, s: (b, 0, s)),
            pl.BlockSpec((Cint, Cin), lambda b, s: (0, 0)),
            pl.BlockSpec((Cint, Cg), lambda b, s: (0, 0)),
            pl.BlockSpec((Cint, 1), lambda b, s: (0, 0)),
            pl.BlockSpec((Cint, 1), lambda b, s: (0, 0)),
            pl.BlockSpec(memory_space=pltpu.MemorySpace.SMEM),
        ],
        out_specs=pl.BlockSpec((1, 1, ts), lambda b, s: (b, 0, s)),
        compiler_params=cparams,
        cost_estimate=cost1,
    )(xr, gr, Wxt, Wgt, b2, Wo2, bo1)

    # --------- BatchNorm2d(1), training mode: batch stats over N*H*W --------
    # Tiny reduction over the stored logits (centered two-pass variance,
    # padded columns excluded), folded into a single scale/shift pair.
    lv = logits[:, :, :HW] if pad else logits
    mean = jnp.mean(lv)
    var = jnp.mean((lv - mean) ** 2)             # biased variance
    inv = 1.0 / jnp.sqrt(var + eps)
    scale = gamma[0] * inv
    shift = beta[0] - mean * scale
    scal = jnp.stack([scale, shift]).astype(f32)

    # ---------------- pass 2: BN + sigmoid + x * attention ------------------
    cost2 = pl.CostEstimate(
        flops=Mp * (2 * Cin + 4),
        transcendentals=Mp,
        bytes_accessed=itemsize * Mp * 2 * Cin + 4 * Mp,
    )
    outp = pl.pallas_call(
        _gate_apply_kernel,
        out_shape=jax.ShapeDtypeStruct((B, Cin, HWp), x_nchw.dtype),
        grid=(B, nt),
        in_specs=[
            pl.BlockSpec(memory_space=pltpu.MemorySpace.SMEM),
            pl.BlockSpec((1, Cin, ts), lambda b, s: (b, 0, s)),
            pl.BlockSpec((1, 1, ts), lambda b, s: (b, 0, s)),
        ],
        out_specs=pl.BlockSpec((1, Cin, ts), lambda b, s: (b, 0, s)),
        compiler_params=cparams,
        cost_estimate=cost2,
    )(scal, xr, logits)

    out = outp[:, :, :HW] if pad else outp
    return out.reshape(B, Cin, H, W)


# ---------------------------------------------------------------------------
# Pure-JAX reference (matches the PyTorch module, training-mode BN)
# ---------------------------------------------------------------------------
def reference_forward(x, gate, params, eps=1e-5):
    Wg, bg, Wx, bx, Wo, bo, gamma, beta = params
    gi = jnp.einsum("bchw,cd->bdhw", gate, Wg) + bg[None, :, None, None]
    xi = jnp.einsum("bchw,cd->bdhw", x, Wx) + bx[None, :, None, None]
    comb = jnp.maximum(gi + xi, 0.0)
    logit = jnp.einsum("bchw,cd->bdhw", comb, Wo) + bo[None, :, None, None]
    mean = jnp.mean(logit)
    var = jnp.mean((logit - mean) ** 2)
    bn = (logit - mean) / jnp.sqrt(var + eps) * gamma[0] + beta[0]
    att = jax.nn.sigmoid(bn)
    return x * att


def init_params(key, gate_channels, in_channels, inter_channels):
    """Deterministic synthetic parameters (weights stored as (C_in, C_out))."""
    ks = jax.random.split(key, 6)
    Wg = jax.random.normal(ks[0], (gate_channels, inter_channels), jnp.float32) * 0.1
    bg = jax.random.normal(ks[1], (inter_channels,), jnp.float32) * 0.1
    Wx = jax.random.normal(ks[2], (in_channels, inter_channels), jnp.float32) * 0.1
    bx = jax.random.normal(ks[3], (inter_channels,), jnp.float32) * 0.1
    Wo = jax.random.normal(ks[4], (inter_channels, 1), jnp.float32) * 0.1
    bo = jax.random.normal(ks[5], (1,), jnp.float32) * 0.1
    gamma = jnp.ones((1,), jnp.float32)   # BatchNorm2d(1) weight init
    beta = jnp.zeros((1,), jnp.float32)   # BatchNorm2d(1) bias init
    return (Wg, bg, Wx, bx, Wo, bo, gamma, beta)


if __name__ == "__main__":
    key = jax.random.PRNGKey(0)
    k_x, k_g, k_p = jax.random.split(key, 3)

    B, in_channels, gate_channels, inter_channels, H, W = 2, 4, 6, 8, 16, 16

    x = jax.random.normal(k_x, (B, in_channels, H, W), jnp.float32)
    gate = jax.random.normal(k_g, (B, gate_channels, H, W), jnp.float32)
    params = init_params(k_p, gate_channels, in_channels, inter_channels)

    out = attention_block_forward(x, gate, params)
    out = jax.block_until_ready(out)

    ref = reference_forward(x, gate, params)
    assert out.shape == x.shape
    assert jnp.allclose(out, ref, atol=1e-5, rtol=1e-5), "mismatch vs JAX reference"

    print("KERNEL_OK")
</pallas_src>

<mosaic_0001>
module attributes {stable_mosaic.version = 11 : i64} {
  func.func @_proj_logit_kernel(%arg0: i32, %arg1: i32, %arg2: memref<1x4x256xf32, #tpu.memory_space<vmem>>, %arg3: memref<1x6x256xf32, #tpu.memory_space<vmem>>, %arg4: memref<8x4xf32, #tpu.memory_space<vmem>>, %arg5: memref<8x6xf32, #tpu.memory_space<vmem>>, %arg6: memref<8x1xf32, #tpu.memory_space<vmem>>, %arg7: memref<8x1xf32, #tpu.memory_space<vmem>>, %arg8: memref<1xf32, #tpu.memory_space<smem>>, %arg9: memref<1x1x256xf32, #tpu.memory_space<vmem>>) attributes {dimension_semantics = [#tpu.dimension_semantics<parallel>, #tpu.dimension_semantics<parallel>], iteration_bounds = array<i64: 2, 1>, scalar_prefetch = 0 : i64, scratch_operands = 0 : i64, tpu.core_type = #tpu.core_type<tc>, window_params = [{transform_indices = @transform_0, window_bounds = array<i64: 1, 4, 256>}, {transform_indices = @transform_1, window_bounds = array<i64: 1, 6, 256>}, {pipeline_mode = #tpu.pipeline_mode<synchronous>, transform_indices = @transform_2, window_bounds = array<i64: 8, 4>}, {pipeline_mode = #tpu.pipeline_mode<synchronous>, transform_indices = @transform_3, window_bounds = array<i64: 8, 6>}, {pipeline_mode = #tpu.pipeline_mode<synchronous>, transform_indices = @transform_4, window_bounds = array<i64: 8, 1>}, {pipeline_mode = #tpu.pipeline_mode<synchronous>, transform_indices = @transform_5, window_bounds = array<i64: 8, 1>}, {transform_indices = @transform_6, window_bounds = array<i64: 1>}, {transform_indices = @transform_7, window_bounds = array<i64: 1, 1, 256>}]} {
    %c0 = arith.constant 0 : index
    %c0_0 = arith.constant 0 : index
    %c0_1 = arith.constant 0 : index
    %0 = vector.load %arg2[%c0, %c0_0, %c0_1] : memref<1x4x256xf32, #tpu.memory_space<vmem>>, vector<1x4x256xf32>
    %1 = vector.shape_cast %0 : vector<1x4x256xf32> to vector<4x256xf32>
    %c0_2 = arith.constant 0 : index
    %c0_3 = arith.constant 0 : index
    %c0_4 = arith.constant 0 : index
    %2 = vector.load %arg3[%c0_2, %c0_3, %c0_4] : memref<1x6x256xf32, #tpu.memory_space<vmem>>, vector<1x6x256xf32>
    %3 = vector.shape_cast %2 : vector<1x6x256xf32> to vector<6x256xf32>
    %c0_5 = arith.constant 0 : index
    %c0_6 = arith.constant 0 : index
    %4 = vector.load %arg4[%c0_5, %c0_6] : memref<8x4xf32, #tpu.memory_space<vmem>>, vector<8x4xf32>
    %cst = arith.constant dense<0.000000e+00> : vector<8x256xf32>
    %5 = tpu.matmul %4, %1, %cst {dimension_numbers = #tpu.dot_dimension_numbers<[1], [0], [0], [1], [0, 0, 1, 1], [], []>} : vector<8x4xf32>, vector<4x256xf32>, vector<8x256xf32> -> vector<8x256xf32>
    %c0_7 = arith.constant 0 : index
    %c0_8 = arith.constant 0 : index
    %6 = vector.load %arg5[%c0_7, %c0_8] : memref<8x6xf32, #tpu.memory_space<vmem>>, vector<8x6xf32>
    %cst_9 = arith.constant dense<0.000000e+00> : vector<8x256xf32>
    %7 = tpu.matmul %6, %3, %cst_9 {dimension_numbers = #tpu.dot_dimension_numbers<[1], [0], [0], [1], [0, 0, 1, 1], [], []>} : vector<8x6xf32>, vector<6x256xf32>, vector<8x256xf32> -> vector<8x256xf32>
    %8 = arith.addf %5, %7 : vector<8x256xf32>
    %c0_10 = arith.constant 0 : index
    %c0_11 = arith.constant 0 : index
    %9 = vector.load %arg6[%c0_10, %c0_11] : memref<8x1xf32, #tpu.memory_space<vmem>>, vector<8x1xf32>
    %10 = vector.broadcast %9 : vector<8x1xf32> to vector<8x256xf32>
    %11 = arith.addf %8, %10 : vector<8x256xf32>
    %cst_12 = arith.constant 0.000000e+00 : f32
    %12 = vector.broadcast %cst_12 : f32 to vector<8x256xf32>
    %13 = arith.maximumf %11, %12 : vector<8x256xf32>
    %c0_13 = arith.constant 0 : index
    %c0_14 = arith.constant 0 : index
    %14 = vector.load %arg7[%c0_13, %c0_14] : memref<8x1xf32, #tpu.memory_space<vmem>>, vector<8x1xf32>
    %15 = vector.broadcast %14 : vector<8x1xf32> to vector<8x256xf32>
    %16 = arith.mulf %13, %15 : vector<8x256xf32>
    %cst_15 = arith.constant dense<0.000000e+00> : vector<256xf32>
    %17 = vector.multi_reduction <add>, %16, %cst_15 [0] : vector<8x256xf32> to vector<256xf32>
    %18 = vector.shape_cast %17 : vector<256xf32> to vector<1x256xf32>
    %c0_16 = arith.constant 0 : index
    %19 = memref.load %arg8[%c0_16] : memref<1xf32, #tpu.memory_space<smem>>
    %20 = vector.broadcast %19 : f32 to vector<1x256xf32>
    %21 = arith.addf %18, %20 : vector<1x256xf32>
    %c0_17 = arith.constant 0 : index
    %c0_18 = arith.constant 0 : index
    %c0_19 = arith.constant 0 : index
    %22 = vector.load %arg9[%c0_17, %c0_18, %c0_19] : memref<1x1x256xf32, #tpu.memory_space<vmem>>, vector<1x1x256xf32>
    %23 = vector.shape_cast %22 : vector<1x1x256xf32> to vector<1x256xf32>
    %24 = vector.shape_cast %21 : vector<1x256xf32> to vector<1x1x256xf32>
    tpu.vector_store %arg9[%c0_17, %c0_18, %c0_19], %24 {strides = array<i32>} : memref<1x1x256xf32, #tpu.memory_space<vmem>>, vector<1x1x256xf32>,
    return
  }
  func.func @transform_0(%arg0: i32, %arg1: i32) -> (i32, i32, i32) {
    %c0_i32 = arith.constant 0 : i32
    %c0_i32_0 = arith.constant 0 : i32
    return %arg0, %c0_i32, %arg1 : i32, i32, i32
  }
  func.func @transform_1(%arg0: i32, %arg1: i32) -> (i32, i32, i32) {
    %c0_i32 = arith.constant 0 : i32
    %c0_i32_0 = arith.constant 0 : i32
    return %arg0, %c0_i32, %arg1 : i32, i32, i32
  }
  func.func @transform_2(%arg0: i32, %arg1: i32) -> (i32, i32) {
    %c0_i32 = arith.constant 0 : i32
    %c0_i32_0 = arith.constant 0 : i32
    %c0_i32_1 = arith.constant 0 : i32
    return %c0_i32, %c0_i32_0 : i32, i32
  }
  func.func @transform_3(%arg0: i32, %arg1: i32) -> (i32, i32) {
    %c0_i32 = arith.constant 0 : i32
    %c0_i32_0 = arith.constant 0 : i32
    %c0_i32_1 = arith.constant 0 : i32
    return %c0_i32, %c0_i32_0 : i32, i32
  }
  func.func @transform_4(%arg0: i32, %arg1: i32) -> (i32, i32) {
    %c0_i32 = arith.constant 0 : i32
    %c0_i32_0 = arith.constant 0 : i32
    %c0_i32_1 = arith.constant 0 : i32
    return %c0_i32, %c0_i32_0 : i32, i32
  }
  func.func @transform_5(%arg0: i32, %arg1: i32) -> (i32, i32) {
    %c0_i32 = arith.constant 0 : i32
    %c0_i32_0 = arith.constant 0 : i32
    %c0_i32_1 = arith.constant 0 : i32
    return %c0_i32, %c0_i32_0 : i32, i32
  }
  func.func @transform_6(%arg0: i32, %arg1: i32) -> i32 {
    %c0_i32 = arith.constant 0 : i32
    %c0_i32_0 = arith.constant 0 : i32
    return %c0_i32 : i32
  }
  func.func @transform_7(%arg0: i32, %arg1: i32) -> (i32, i32, i32) {
    %c0_i32 = arith.constant 0 : i32
    %c0_i32_0 = arith.constant 0 : i32
    return %arg0, %c0_i32, %arg1 : i32, i32, i32
  }
}

module attributes {stable_mosaic.version = 11 : i64} {
  func.func @_gate_apply_kernel(%arg0: i32, %arg1: i32, %arg2: memref<2xf32, #tpu.memory_space<smem>>, %arg3: memref<1x4x256xf32, #tpu.memory_space<vmem>>, %arg4: memref<1x1x256xf32, #tpu.memory_space<vmem>>, %arg5: memref<1x4x256xf32, #tpu.memory_space<vmem>>) attributes {dimension_semantics = [#tpu.dimension_semantics<parallel>, #tpu.dimension_semantics<parallel>], iteration_bounds = array<i64: 2, 1>, scalar_prefetch = 0 : i64, scratch_operands = 0 : i64, tpu.core_type = #tpu.core_type<tc>, window_params = [{transform_indices = @transform_0, window_bounds = array<i64: 2>}, {transform_indices = @transform_1, window_bounds = array<i64: 1, 4, 256>}, {transform_indices = @transform_2, window_bounds = array<i64: 1, 1, 256>}, {transform_indices = @transform_3, window_bounds = array<i64: 1, 4, 256>}]} {
    %c0 = arith.constant 0 : index
    %c0_0 = arith.constant 0 : index
    %c0_1 = arith.constant 0 : index
    %0 = vector.load %arg4[%c0, %c0_0, %c0_1] : memref<1x1x256xf32, #tpu.memory_space<vmem>>, vector<1x1x256xf32>
    %1 = vector.shape_cast %0 : vector<1x1x256xf32> to vector<1x256xf32>
    %c0_2 = arith.constant 0 : index
    %2 = memref.load %arg2[%c0_2] : memref<2xf32, #tpu.memory_space<smem>>
    %3 = vector.broadcast %2 : f32 to vector<1x256xf32>
    %4 = arith.mulf %1, %3 : vector<1x256xf32>
    %c1 = arith.constant 1 : index
    %5 = memref.load %arg2[%c1] : memref<2xf32, #tpu.memory_space<smem>>
    %6 = vector.broadcast %5 : f32 to vector<1x256xf32>
    %7 = arith.addf %4, %6 : vector<1x256xf32>
    %8 = arith.negf %7 : vector<1x256xf32>
    %9 = math.exp %8 : vector<1x256xf32>
    %cst = arith.constant 1.000000e+00 : f32
    %10 = vector.broadcast %cst : f32 to vector<1x256xf32>
    %11 = arith.addf %10, %9 : vector<1x256xf32>
    %12 = arith.divf %10, %11 : vector<1x256xf32>
    %c0_3 = arith.constant 0 : index
    %c0_4 = arith.constant 0 : index
    %c0_5 = arith.constant 0 : index
    %13 = vector.load %arg3[%c0_3, %c0_4, %c0_5] : memref<1x4x256xf32, #tpu.memory_space<vmem>>, vector<1x4x256xf32>
    %14 = vector.shape_cast %13 : vector<1x4x256xf32> to vector<4x256xf32>
    %15 = vector.broadcast %12 : vector<1x256xf32> to vector<4x256xf32>
    %16 = arith.mulf %14, %15 : vector<4x256xf32>
    %c0_6 = arith.constant 0 : index
    %c0_7 = arith.constant 0 : index
    %c0_8 = arith.constant 0 : index
    %17 = vector.load %arg5[%c0_6, %c0_7, %c0_8] : memref<1x4x256xf32, #tpu.memory_space<vmem>>, vector<1x4x256xf32>
    %18 = vector.shape_cast %17 : vector<1x4x256xf32> to vector<4x256xf32>
    %19 = vector.shape_cast %16 : vector<4x256xf32> to vector<1x4x256xf32>
    tpu.vector_store %arg5[%c0_6, %c0_7, %c0_8], %19 {strides = array<i32>} : memref<1x4x256xf32, #tpu.memory_space<vmem>>, vector<1x4x256xf32>,
    return
  }
  func.func @transform_0(%arg0: i32, %arg1: i32) -> i32 {
    %c0_i32 = arith.constant 0 : i32
    %c0_i32_0 = arith.constant 0 : i32
    return %c0_i32 : i32
  }
  func.func @transform_1(%arg0: i32, %arg1: i32) -> (i32, i32, i32) {
    %c0_i32 = arith.constant 0 : i32
    %c0_i32_0 = arith.constant 0 : i32
    return %arg0, %c0_i32, %arg1 : i32, i32, i32
  }
  func.func @transform_2(%arg0: i32, %arg1: i32) -> (i32, i32, i32) {
    %c0_i32 = arith.constant 0 : i32
    %c0_i32_0 = arith.constant 0 : i32
    return %arg0, %c0_i32, %arg1 : i32, i32, i32
  }
  func.func @transform_3(%arg0: i32, %arg1: i32) -> (i32, i32, i32) {
    %c0_i32 = arith.constant 0 : i32
    %c0_i32_0 = arith.constant 0 : i32
    return %arg0, %c0_i32, %arg1 : i32, i32, i32
  }
}

</mosaic_0001>

<llo_original>
// kernel: attention_block_forward.3
$region0: #{attention_block_forward.3}
  #allocation0 [shape = 'u32[]', space=smem, size = 0x4, offset = 0x4, fixed_abs, tag = 'smem constant byte address 0x4 - core index']
  #allocation1 [shape = 'u32[144,128]{1,0:T(1,128)}', space=vmem, size = 0x12000, scoped, tag = 'internal scratch']
  %s0 = inlined_call_operand.vmem [shape: f32[2], index: 0, kind: input, shape index: {}]
  %s1 = inlined_call_operand.vmem [shape: f32[2,4,256], index: 1, kind: input, shape index: {}]
  %s2 = inlined_call_operand.vmem [shape: f32[2,1,256], index: 2, kind: input, shape index: {}]
  %s3 = inlined_call_operand.vmem [shape: f32[2,4,256], index: 3, kind: output, shape index: {}]
  %s4 = sld [smem:[#allocation0]]
  $region49: #{attention_block_forward.3} parent=0
    _
  %s6 = ssub.s32 1, %s4
  %s7 = scalar_select 0, %s6, %s4
  $region1: #{attention_block_forward.3} parent=0
    #allocation2 [shape = 'u8[512]{0}', space=smem, size = 0x200, scoped, tag = 'input window, operand 0, single buffered']
    #allocation3 [shape = 's32[2]{0}', space=sflag, size = 0x8, scoped, tag = 'scoped memory for attention_block_forward.3']
    %8 = vsyncpa [#allocation3], 0
    loop: start=0, step=1, limit=4
    $region2: #{attention_block_forward.3} parent=1 // loop_pre_header
      _
    $region3: #{attention_block_forward.3} parent=1 // loop_header
      %s10 = sphi 0, %s14
      %p11 = scmp.ge.s32.totalorder %s10, 4
      %s17 = sphi 0, %s29
      %s18 = sphi 0, %s25
      %s19 = sphi 0, %s17
      %s20 = sphi 0, %s18
      %s21 = sphi 0, %s19
      %s22 = sphi 0, %s20
      %s30 = sphi 0, %s30
      %s32 = sphi 0, %s30
      %s33 = sphi 0, %s32
      %s47 = sphi 0, %s33
      %s55 = sphi 0, %s57
      %s58 = sphi 0, %s55
      %s59 = sphi 0, %s58
      %s75 = sphi 0, %s59
      %s83 = sphi 0, %s85
      %s86 = sphi 0, %s83
      %s87 = sphi 0, %s86
      %s103 = sphi 0, %s87
      %s111 = sphi 0, %s113
      %s114 = sphi 0, %s111
      %s115 = sphi 0, %s114
      %s131 = sphi 0, %s115
    $region4: #{attention_block_forward.3} parent=1 // loop_header_branch
      %13 = sbr.rel (%p11) target = $region8
    $region5: #{attention_block_forward.3} parent=1 // loop_body
      %s15 = ssub.s32 %s10, 1
      %s16 = ssub.s32 %s10, 2
      %s23 = sadd.s32 1, %s18
      %p24 = scmp.ge.s32.totalorder %s23, 1
      %s25 = scalar_select %p24, 0, %s23
      %s26 = sadd.s32 1, %s17
      %s27 = scalar_select %p24, %s26, %s17
      %p28 = scmp.ge.s32.totalorder %s27, 2
      %s29 = scalar_select %p28, 0, %s27
      %s31 = sadd.s32 %s30, 1
      %p34 = scmp.eq.s32.totalorder %s10, 1
      %p35 = scmp.ne.s32.totalorder %s30, %s32
      %p36 = scmp.eq.s32.totalorder %s10, 0
      %p37 = por %p35, %p36
      %p38 = scmp.ne.s32.totalorder %s30, %s32
      %p39 = scmp.eq.s32.totalorder %s15, 1
      %p40 = por %p38, %p39
      %p41 = scmp.ne.s32.totalorder %s32, %s33
      %p42 = scmp.eq.s32.totalorder %s15, 0
      %p43 = por %p41, %p42
      %p44 = scmp.ne.s32.totalorder %s32, %s33
      %p45 = scmp.eq.s32.totalorder %s16, 1
      %p46 = por %p44, %p45
      %p48 = scmp.ne.s32.totalorder %s33, %s47
      %p49 = scmp.eq.s32.totalorder %s16, 0
      %p50 = por %p48, %p49
      %s51 = ssub.s32 %s17, %s29
      %s52 = ssub.s32 %s18, %s25
      %s53 = sor.u32 %s51, %s52
      %p54 = scmp.eq.s32.totalorder %s53, 0
      %s56 = sadd.s32 %s55, 1
      %s57 = scalar_select %p54, %s55, %s56
      %p60 = pneg %p54
      %p61 = scmp.eq.s32.totalorder %s10, 1
      %p62 = por %p60, %p61
      %p63 = scmp.ne.s32.totalorder %s55, %s58
      %p64 = scmp.eq.s32.totalorder %s10, 0
      %p65 = por %p63, %p64
      %p66 = scmp.ne.s32.totalorder %s55, %s58
      %p67 = scmp.eq.s32.totalorder %s15, 1
      %p68 = por %p66, %p67
      %p69 = scmp.ne.s32.totalorder %s58, %s59
      %p70 = scmp.eq.s32.totalorder %s15, 0
      %p71 = por %p69, %p70
      %p72 = scmp.ne.s32.totalorder %s58, %s59
      %p73 = scmp.eq.s32.totalorder %s16, 1
      %p74 = por %p72, %p73
      %p76 = scmp.ne.s32.totalorder %s59, %s75
      %p77 = scmp.eq.s32.totalorder %s16, 0
      %p78 = por %p76, %p77
      %s79 = ssub.s32 %s17, %s29
      %s80 = ssub.s32 %s18, %s25
      %s81 = sor.u32 %s79, %s80
      %p82 = scmp.eq.s32.totalorder %s81, 0
      %s84 = sadd.s32 %s83, 1
      %s85 = scalar_select %p82, %s83, %s84
      %p88 = pneg %p82
      %p89 = scmp.eq.s32.totalorder %s10, 1
      %p90 = por %p88, %p89
      %p91 = scmp.ne.s32.totalorder %s83, %s86
      %p92 = scmp.eq.s32.totalorder %s10, 0
      %p93 = por %p91, %p92
      %p94 = scmp.ne.s32.totalorder %s83, %s86
      %p95 = scmp.eq.s32.totalorder %s15, 1
      %p96 = por %p94, %p95
      %p97 = scmp.ne.s32.totalorder %s86, %s87
      %p98 = scmp.eq.s32.totalorder %s15, 0
      %p99 = por %p97, %p98
      %p100 = scmp.ne.s32.totalorder %s86, %s87
      %p101 = scmp.eq.s32.totalorder %s16, 1
      %p102 = por %p100, %p101
      %p104 = scmp.ne.s32.totalorder %s87, %s103
      %p105 = scmp.eq.s32.totalorder %s16, 0
      %p106 = por %p104, %p105
      %s107 = ssub.s32 %s17, %s29
      %s108 = ssub.s32 %s18, %s25
      %s109 = sor.u32 %s107, %s108
      %p110 = scmp.eq.s32.totalorder %s109, 0
      %s112 = sadd.s32 %s111, 1
      %s113 = scalar_select %p110, %s111, %s112
      %p116 = pneg %p110
      %p117 = scmp.eq.s32.totalorder %s10, 1
      %p118 = por %p116, %p117
      %p119 = scmp.ne.s32.totalorder %s111, %s114
      %p120 = scmp.eq.s32.totalorder %s10, 0
      %p121 = por %p119, %p120
      %p122 = scmp.ne.s32.totalorder %s111, %s114
      %p123 = scmp.eq.s32.totalorder %s15, 1
      %p124 = por %p122, %p123
      %p125 = scmp.ne.s32.totalorder %s114, %s115
      %p126 = scmp.eq.s32.totalorder %s15, 0
      %p127 = por %p125, %p126
      %p128 = scmp.ne.s32.totalorder %s114, %s115
      %p129 = scmp.eq.s32.totalorder %s16, 1
      %p130 = por %p128, %p129
      %p132 = scmp.ne.s32.totalorder %s115, %s131
      %p133 = scmp.eq.s32.totalorder %s16, 0
      %p134 = por %p132, %p133
      %p135 = scmp.le.s32.totalorder 1, %s10
      %p136 = scmp.lt.s32.totalorder %s10, 3
      %p137 = pnand %p135, %p136
      %p138 = pneg %p137
      // Predicated region
      $region9: #{attention_block_forward.3} parent=5 // pred_check
        _
      $region10: #{attention_block_forward.3} parent=5 // pred_check_branch
        %140 = sbr.rel (%p137) target = $region12
      $region11: #{attention_block_forward.3} parent=5 // pred_region
        %s141 = ssub.s32 %s10, 1
        // Predicated region
        $region13: #{attention_block_forward.3} parent=11 // pred_check
          %p142 = pneg %p43
        $region14: #{attention_block_forward.3} parent=11 // pred_check_branch
          %144 = sbr.rel (%p142) target = $region16
        $region15: #{attention_block_forward.3} parent=11 // pred_region
          %s146 = ssub.s32 16, 16
          %147 = vsyncadd [#allocation3], %s146
          %s149 = sshll.u32 %s0, 4
          %s150 = int_to_ptr.vmem [resolvable:$true] %s149
          %152 = dma.vmem_to_smem %s150, 16, [#allocation2], [#allocation3]
        $region16: #{attention_block_forward.3} parent=11 // pred_fallthru
          _
      $region12: #{attention_block_forward.3} parent=5 // pred_fallthru
        _
      %p153 = scmp.lt.s32.totalorder %s10, 2
      // Predicated region
      $region17: #{attention_block_forward.3} parent=5 // pred_check
        %p154 = pneg %p153
      $region18: #{attention_block_forward.3} parent=5 // pred_check_branch
        %156 = sbr.rel (%p154) target = $region20
      $region19: #{attention_block_forward.3} parent=5 // pred_region
        // Predicated region
        $region21: #{attention_block_forward.3} parent=19 // pred_check
          %p157 = pneg %p65
        $region22: #{attention_block_forward.3} parent=19 // pred_check_branch
          %159 = sbr.rel (%p157) target = $region24
        $region23: #{attention_block_forward.3} parent=19 // pred_region
          %s160 = smul.u32 2, %s18
          %p161 = scmp.lt.s32.totalorder %s17, 1
          %s162 = scalar_select %p161, %s17, 1
          %p163 = scmp.lt.s32.totalorder %s160, 1
          %s164 = scalar_select %p163, %s160, 1
          %s165 = smul.addr %s162, 2
          %s166 = sadd.s32 %s164, %s165
          %s167 = smul.addr %s166, 4
          %s168 = scalar_lea.vmem %s1, %s167
          %s169 = smul.u32 2, %s18
        $region24: #{attention_block_forward.3} parent=19 // pred_fallthru
          _
        // Predicated region
        $region25: #{attention_block_forward.3} parent=19 // pred_check
          %p170 = pneg %p93
        $region26: #{attention_block_forward.3} parent=19 // pred_check_branch
          %172 = sbr.rel (%p170) target = $region28
        $region27: #{attention_block_forward.3} parent=19 // pred_region
          %s173 = smul.u32 2, %s18
          %p174 = scmp.lt.s32.totalorder %s17, 1
          %s175 = scalar_select %p174, %s17, 1
          %p176 = scmp.lt.s32.totalorder %s173, 1
          %s177 = scalar_select %p176, %s173, 1
          %s178 = smul.addr %s175, 2
          %s179 = sadd.s32 %s177, %s178
          %s180 = scalar_lea.vmem %s2, %s179
          %s181 = smul.u32 2, %s18
        $region28: #{attention_block_forward.3} parent=19 // pred_fallthru
          _
      $region20: #{attention_block_forward.3} parent=5 // pred_fallthru
        _
      %p182 = scmp.le.s32.totalorder 1, %s10
      %p183 = scmp.lt.s32.totalorder %s10, 3
      %p184 = pnand %p182, %p183
      %p185 = pneg %p184
      // Predicated region
      $region29: #{attention_block_forward.3} parent=5 // pred_check
        _
      $region30: #{attention_block_forward.3} parent=5 // pred_check_branch
        %187 = sbr.rel (%p184) target = $region32
      $region31: #{attention_block_forward.3} parent=5 // pred_region
        %s188 = ssub.s32 %s10, 1
        // Predicated region
        $region33: #{attention_block_forward.3} parent=31 // pred_check
          %p189 = pneg %p43
        $region34: #{attention_block_forward.3} parent=31 // pred_check_branch
          %191 = sbr.rel (%p189) target = $region36
        $region35: #{attention_block_forward.3} parent=31 // pred_region
          %192 = dma.done [#allocation3], 16
        $region36: #{attention_block_forward.3} parent=31 // pred_fallthru
          _
        %193 = sfence
        %p194 = pneg %p43
        %p195 = pneg %p40
        %s196 = smul.u32 2, %s20
        %p197 = scmp.lt.s32.totalorder %s19, 1
        %s198 = scalar_select %p197, %s19, 1
        %p199 = scmp.lt.s32.totalorder %s196, 1
        %s200 = scalar_select %p199, %s196, 1
        %s201 = smul.addr %s198, 2
        %s202 = sadd.s32 %s200, %s201
        %s203 = smul.addr %s202, 4
        %s204 = scalar_lea.vmem %s1, %s203
        %p205 = pneg %p71
        %p206 = pneg %p68
        %s207 = smul.u32 2, %s20
        %p208 = scmp.lt.s32.totalorder %s19, 1
        %s209 = scalar_select %p208, %s19, 1
        %p210 = scmp.lt.s32.totalorder %s207, 1
        %s211 = scalar_select %p210, %s207, 1
        %s212 = smul.addr %s209, 2
        %s213 = sadd.s32 %s211, %s212
        %s214 = scalar_lea.vmem %s2, %s213
        %p215 = pneg %p99
        %p216 = pneg %p96
        %p217 = pneg %p127
        %p218 = pneg %p124
        %s219 = smul.u32 2, %s20
        %p220 = scmp.lt.s32.totalorder %s19, 1
        %s221 = scalar_select %p220, %s19, 1
        %p222 = scmp.lt.s32.totalorder %s219, 1
        %s223 = scalar_select %p222, %s219, 1
        %s224 = smul.addr %s221, 2
        %s225 = sadd.s32 %s223, %s224
        %s226 = smul.addr %s225, 4
        %s227 = scalar_lea.vmem %s3, %s226
        %s228 = smul.u32 2, %s20
        %p229 = scmp.lt.s32.totalorder %s19, 1
        %s230 = scalar_select %p229, %s19, 1
        %p231 = scmp.lt.s32.totalorder %s228, 1
        %s232 = scalar_select %p231, %s228, 1
        %s233 = smul.addr %s230, 2
        %s234 = sadd.s32 %s232, %s233
        %s235 = smul.addr %s234, 4
        %s236 = scalar_lea.vmem %s1, %s235
        %s237 = smul.u32 2, %s20
        %s238 = smul.u32 2, %s20
        %p239 = scmp.lt.s32.totalorder %s19, 1
        %s240 = scalar_select %p239, %s19, 1
        %p241 = scmp.lt.s32.totalorder %s238, 1
        %s242 = scalar_select %p241, %s238, 1
        %s243 = smul.addr %s240, 2
        %s244 = sadd.s32 %s242, %s243
        %s245 = scalar_lea.vmem %s2, %s244
        %s246 = smul.u32 2, %s20
        %s247 = smul.u32 2, %s20
        %p248 = scmp.lt.s32.totalorder %s19, 1
        %s249 = scalar_select %p248, %s19, 1
        %p250 = scmp.lt.s32.totalorder %s247, 1
        %s251 = scalar_select %p250, %s247, 1
        %s252 = smul.addr %s249, 2
        %s253 = sadd.s32 %s251, %s252
        %s254 = smul.addr %s253, 4
        %s255 = scalar_lea.vmem %s3, %s254
        %s256 = smul.u32 2, %s20
        %v257 = vld [vmem:[%s245] sm:$0x3]
        %s258 = sld [smem:[#allocation2]]
        %v259 = vstv %s258
        %v260 = vmul.f32 %v257, %v259
        %s261 = sld [smem:[#allocation2 + $0x1]]
        %v262 = vstv %s261
        %v263 = vadd.f32 %v260, %v262
        %v264 = vxor.u32 %v263, 2147483648
        %v265 = vmul.f32 %v264, 1.442695
        %v266 = vpow.pop %v265
        %v267 = vadd.f32 %v266, 1.0
        %v268 = vrcp.pop %v267
        %v269 = vmul.f32 1.0, %v268
        %v270 = vld [vmem:[%s236] sm:$0xff]
        %v272 = vlaneseq
        %v273 = vshrl.u32 %v272, 7
        %v274 = vsub.s32 0, %v273
        %v275 = vrot.slane %v269, %v274
        %v276 = vlaneseq
        %v277 = vshrl.u32 %v276, 7
        %v278 = vsub.s32 1, %v277
        %v279 = vrot.slane %v269, %v278
        %v280 = vcombine.low %v275, %v279
        %v282 = vmul.f32 %v270, %v280
        %283 = vst [vmem:[%s255] sm:$0xff] %v282
        %s284 = smul.u32 2, %s20
        %p285 = scmp.lt.s32.totalorder %s19, 1
        %s286 = scalar_select %p285, %s19, 1
        %p287 = scmp.lt.s32.totalorder %s284, 1
        %s288 = scalar_select %p287, %s284, 1
        %s289 = smul.addr %s286, 2
        %s290 = sadd.s32 %s288, %s289
        %s291 = smul.addr %s290, 4
        %s292 = scalar_lea.vmem %s3, %s291
        // Predicated region
        $region37: #{attention_block_forward.3} parent=31 // pred_check
          %p293 = pneg %p124
        $region38: #{attention_block_forward.3} parent=31 // pred_check_branch
          %295 = sbr.rel (%p293) target = $region40
        $region39: #{attention_block_forward.3} parent=31 // pred_region
          %s296 = smul.u32 2, %s20
        $region40: #{attention_block_forward.3} parent=31 // pred_fallthru
          _
      $region32: #{attention_block_forward.3} parent=5 // pred_fallthru
        _
      %p297 = scmp.le.s32.totalorder 2, %s10
      // Predicated region
      $region41: #{attention_block_forward.3} parent=5 // pred_check
        %p298 = pneg %p297
      $region42: #{attention_block_forward.3} parent=5 // pred_check_branch
        %300 = sbr.rel (%p298) target = $region44
      $region43: #{attention_block_forward.3} parent=5 // pred_region
        %s301 = ssub.s32 %s10, 2
        // Predicated region
        $region45: #{attention_block_forward.3} parent=43 // pred_check
          %p302 = pneg %p130
        $region46: #{attention_block_forward.3} parent=43 // pred_check_branch
          %304 = sbr.rel (%p302) target = $region48
        $region47: #{attention_block_forward.3} parent=43 // pred_region
          %s305 = smul.u32 2, %s22
          %p306 = scmp.lt.s32.totalorder %s21, 1
          %s307 = scalar_select %p306, %s21, 1
          %p308 = scmp.lt.s32.totalorder %s305, 1
          %s309 = scalar_select %p308, %s305, 1
          %s310 = smul.addr %s307, 2
          %s311 = sadd.s32 %s309, %s310
          %s312 = smul.addr %s311, 4
          %s313 = scalar_lea.vmem %s3, %s312
        $region48: #{attention_block_forward.3} parent=43 // pred_fallthru
          _
      $region44: #{attention_block_forward.3} parent=5 // pred_fallthru
        _
    $region6: #{attention_block_forward.3} parent=1 // loop_footer
      %s14 = sadd.s32 1, %s10
    $region7: #{attention_block_forward.3} parent=1 // loop_footer_branch
      %9 = sbr.rel target = $region3
    $region8: #{attention_block_forward.3} parent=1 // loop_exit
      _
    %314 = vsyncpa [#allocation3], 1
    %s315 = scalar_lea.sflag [#allocation3], 1
    %316 = vsyncpa %s315, 1

// kernel: attention_block_forward.2
$region0: #{attention_block_forward.2}
  #allocation0 [shape = 'u32[]', space=smem, size = 0x4, offset = 0x4, fixed_abs, tag = 'smem constant byte address 0x4 - core index']
  #allocation1 [shape = 'u32[144,128]{1,0:T(1,128)}', space=vmem, size = 0x12000, scoped, tag = 'internal scratch']
  #allocation2 [shape = 'f32[1]{0:T(128)S(6)}', space=smem, size = 0x200, scoped, tag = 'scoped memory for attention_block_forward.2']
  %s0 = inlined_call_operand.vmem [shape: f32[2,4,256], index: 0, kind: input, shape index: {}]
  %s1 = inlined_call_operand.vmem [shape: f32[2,6,256], index: 1, kind: input, shape index: {}]
  %s2 = inlined_call_operand.vmem [shape: f32[8,4], index: 2, kind: input, shape index: {}]
  %s3 = inlined_call_operand.vmem [shape: f32[8,6], index: 3, kind: input, shape index: {}]
  %s4 = inlined_call_operand.vmem [shape: f32[8,1], index: 4, kind: input, shape index: {}]
  %s5 = inlined_call_operand.vmem [shape: f32[8,1], index: 5, kind: input, shape index: {}]
  %s6 = inlined_call_operand.<no memory space> [shape: f32[1], index: 6, kind: input, shape index: {}]
  %s7 = inlined_call_operand.vmem [shape: f32[2,1,256], index: 7, kind: output, shape index: {}]
  %s8 = sld [smem:[#allocation0]]
  $region61: #{attention_block_forward.2} parent=0
    _
  %s10 = ssub.s32 1, %s8
  %s11 = scalar_select 0, %s10, %s8
  %12 = sst [smem:[#allocation2]] %s6
  loop: start=0, step=1, limit=4
  $region2: #{attention_block_forward.2} parent=0 // loop_pre_header
    _
  $region3: #{attention_block_forward.2} parent=0 // loop_header
    %s14 = sphi 0, %s18
    %p15 = scmp.ge.s32.totalorder %s14, 4
    %s21 = sphi 0, %s33
    %s22 = sphi 0, %s29
    %s23 = sphi 0, %s21
    %s24 = sphi 0, %s22
    %s25 = sphi 0, %s23
    %s26 = sphi 0, %s24
    %s38 = sphi 0, %s40
    %s41 = sphi 0, %s38
    %s42 = sphi 0, %s41
    %s58 = sphi 0, %s42
    %s66 = sphi 0, %s68
    %s69 = sphi 0, %s66
    %s70 = sphi 0, %s69
    %s86 = sphi 0, %s70
    %s90 = sphi 0, %s90
    %s92 = sphi 0, %s90
    %s93 = sphi 0, %s92
    %s107 = sphi 0, %s93
    %s111 = sphi 0, %s111
    %s113 = sphi 0, %s111
    %s114 = sphi 0, %s113
    %s128 = sphi 0, %s114
    %s132 = sphi 0, %s132
    %s134 = sphi 0, %s132
    %s135 = sphi 0, %s134
    %s149 = sphi 0, %s135
    %s153 = sphi 0, %s153
    %s155 = sphi 0, %s153
    %s156 = sphi 0, %s155
    %s170 = sphi 0, %s156
    %s174 = sphi 0, %s174
    %s176 = sphi 0, %s174
    %s177 = sphi 0, %s176
    %s191 = sphi 0, %s177
    %s199 = sphi 0, %s201
    %s202 = sphi 0, %s199
    %s203 = sphi 0, %s202
    %s219 = sphi 0, %s203
  $region4: #{attention_block_forward.2} parent=0 // loop_header_branch
    %17 = sbr.rel (%p15) target = $region8
  $region5: #{attention_block_forward.2} parent=0 // loop_body
    %s19 = ssub.s32 %s14, 1
    %s20 = ssub.s32 %s14, 2
    %s27 = sadd.s32 1, %s22
    %p28 = scmp.ge.s32.totalorder %s27, 1
    %s29 = scalar_select %p28, 0, %s27
    %s30 = sadd.s32 1, %s21
    %s31 = scalar_select %p28, %s30, %s21
    %p32 = scmp.ge.s32.totalorder %s31, 2
    %s33 = scalar_select %p32, 0, %s31
    %s34 = ssub.s32 %s21, %s33
    %s35 = ssub.s32 %s22, %s29
    %s36 = sor.u32 %s34, %s35
    %p37 = scmp.eq.s32.totalorder %s36, 0
    %s39 = sadd.s32 %s38, 1
    %s40 = scalar_select %p37, %s38, %s39
    %p43 = pneg %p37
    %p44 = scmp.eq.s32.totalorder %s14, 1
    %p45 = por %p43, %p44
    %p46 = scmp.ne.s32.totalorder %s38, %s41
    %p47 = scmp.eq.s32.totalorder %s14, 0
    %p48 = por %p46, %p47
    %p49 = scmp.ne.s32.totalorder %s38, %s41
    %p50 = scmp.eq.s32.totalorder %s19, 1
    %p51 = por %p49, %p50
    %p52 = scmp.ne.s32.totalorder %s41, %s42
    %p53 = scmp.eq.s32.totalorder %s19, 0
    %p54 = por %p52, %p53
    %p55 = scmp.ne.s32.totalorder %s41, %s42
    %p56 = scmp.eq.s32.totalorder %s20, 1
    %p57 = por %p55, %p56
    %p59 = scmp.ne.s32.totalorder %s42, %s58
    %p60 = scmp.eq.s32.totalorder %s20, 0
    %p61 = por %p59, %p60
    %s62 = ssub.s32 %s21, %s33
    %s63 = ssub.s32 %s22, %s29
    %s64 = sor.u32 %s62, %s63
    %p65 = scmp.eq.s32.totalorder %s64, 0
    %s67 = sadd.s32 %s66, 1
    %s68 = scalar_select %p65, %s66, %s67
    %p71 = pneg %p65
    %p72 = scmp.eq.s32.totalorder %s14, 1
    %p73 = por %p71, %p72
    %p74 = scmp.ne.s32.totalorder %s66, %s69
    %p75 = scmp.eq.s32.totalorder %s14, 0
    %p76 = por %p74, %p75
    %p77 = scmp.ne.s32.totalorder %s66, %s69
    %p78 = scmp.eq.s32.totalorder %s19, 1
    %p79 = por %p77, %p78
    %p80 = scmp.ne.s32.totalorder %s69, %s70
    %p81 = scmp.eq.s32.totalorder %s19, 0
    %p82 = por %p80, %p81
    %p83 = scmp.ne.s32.totalorder %s69, %s70
    %p84 = scmp.eq.s32.totalorder %s20, 1
    %p85 = por %p83, %p84
    %p87 = scmp.ne.s32.totalorder %s70, %s86
    %p88 = scmp.eq.s32.totalorder %s20, 0
    %p89 = por %p87, %p88
    %s91 = sadd.s32 %s90, 1
    %p94 = scmp.eq.s32.totalorder %s14, 1
    %p95 = scmp.ne.s32.totalorder %s90, %s92
    %p96 = scmp.eq.s32.totalorder %s14, 0
    %p97 = por %p95, %p96
    %p98 = scmp.ne.s32.totalorder %s90, %s92
    %p99 = scmp.eq.s32.totalorder %s19, 1
    %p100 = por %p98, %p99
    %p101 = scmp.ne.s32.totalorder %s92, %s93
    %p102 = scmp.eq.s32.totalorder %s19, 0
    %p103 = por %p101, %p102
    %p104 = scmp.ne.s32.totalorder %s92, %s93
    %p105 = scmp.eq.s32.totalorder %s20, 1
    %p106 = por %p104, %p105
    %p108 = scmp.ne.s32.totalorder %s93, %s107
    %p109 = scmp.eq.s32.totalorder %s20, 0
    %p110 = por %p108, %p109
    %s112 = sadd.s32 %s111, 1
    %p115 = scmp.eq.s32.totalorder %s14, 1
    %p116 = scmp.ne.s32.totalorder %s111, %s113
    %p117 = scmp.eq.s32.totalorder %s14, 0
    %p118 = por %p116, %p117
    %p119 = scmp.ne.s32.totalorder %s111, %s113
    %p120 = scmp.eq.s32.totalorder %s19, 1
    %p121 = por %p119, %p120
    %p122 = scmp.ne.s32.totalorder %s113, %s114
    %p123 = scmp.eq.s32.totalorder %s19, 0
    %p124 = por %p122, %p123
    %p125 = scmp.ne.s32.totalorder %s113, %s114
    %p126 = scmp.eq.s32.totalorder %s20, 1
    %p127 = por %p125, %p126
    %p129 = scmp.ne.s32.totalorder %s114, %s128
    %p130 = scmp.eq.s32.totalorder %s20, 0
    %p131 = por %p129, %p130
    %s133 = sadd.s32 %s132, 1
    %p136 = scmp.eq.s32.totalorder %s14, 1
    %p137 = scmp.ne.s32.totalorder %s132, %s134
    %p138 = scmp.eq.s32.totalorder %s14, 0
    %p139 = por %p137, %p138
    %p140 = scmp.ne.s32.totalorder %s132, %s134
    %p141 = scmp.eq.s32.totalorder %s19, 1
    %p142 = por %p140, %p141
    %p143 = scmp.ne.s32.totalorder %s134, %s135
    %p144 = scmp.eq.s32.totalorder %s19, 0
    %p145 = por %p143, %p144
    %p146 = scmp.ne.s32.totalorder %s134, %s135
    %p147 = scmp.eq.s32.totalorder %s20, 1
    %p148 = por %p146, %p147
    %p150 = scmp.ne.s32.totalorder %s135, %s149
    %p151 = scmp.eq.s32.totalorder %s20, 0
    %p152 = por %p150, %p151
    %s154 = sadd.s32 %s153, 1
    %p157 = scmp.eq.s32.totalorder %s14, 1
    %p158 = scmp.ne.s32.totalorder %s153, %s155
    %p159 = scmp.eq.s32.totalorder %s14, 0
    %p160 = por %p158, %p159
    %p161 = scmp.ne.s32.totalorder %s153, %s155
    %p162 = scmp.eq.s32.totalorder %s19, 1
    %p163 = por %p161, %p162
    %p164 = scmp.ne.s32.totalorder %s155, %s156
    %p165 = scmp.eq.s32.totalorder %s19, 0
    %p166 = por %p164, %p165
    %p167 = scmp.ne.s32.totalorder %s155, %s156
    %p168 = scmp.eq.s32.totalorder %s20, 1
    %p169 = por %p167, %p168
    %p171 = scmp.ne.s32.totalorder %s156, %s170
    %p172 = scmp.eq.s32.totalorder %s20, 0
    %p173 = por %p171, %p172
    %s175 = sadd.s32 %s174, 1
    %p178 = scmp.eq.s32.totalorder %s14, 1
    %p179 = scmp.ne.s32.totalorder %s174, %s176
    %p180 = scmp.eq.s32.totalorder %s14, 0
    %p181 = por %p179, %p180
    %p182 = scmp.ne.s32.totalorder %s174, %s176
    %p183 = scmp.eq.s32.totalorder %s19, 1
    %p184 = por %p182, %p183
    %p185 = scmp.ne.s32.totalorder %s176, %s177
    %p186 = scmp.eq.s32.totalorder %s19, 0
    %p187 = por %p185, %p186
    %p188 = scmp.ne.s32.totalorder %s176, %s177
    %p189 = scmp.eq.s32.totalorder %s20, 1
    %p190 = por %p188, %p189
    %p192 = scmp.ne.s32.totalorder %s177, %s191
    %p193 = scmp.eq.s32.totalorder %s20, 0
    %p194 = por %p192, %p193
    %s195 = ssub.s32 %s21, %s33
    %s196 = ssub.s32 %s22, %s29
    %s197 = sor.u32 %s195, %s196
    %p198 = scmp.eq.s32.totalorder %s197, 0
    %s200 = sadd.s32 %s199, 1
    %s201 = scalar_select %p198, %s199, %s200
    %p204 = pneg %p198
    %p205 = scmp.eq.s32.totalorder %s14, 1
    %p206 = por %p204, %p205
    %p207 = scmp.ne.s32.totalorder %s199, %s202
    %p208 = scmp.eq.s32.totalorder %s14, 0
    %p209 = por %p207, %p208
    %p210 = scmp.ne.s32.totalorder %s199, %s202
    %p211 = scmp.eq.s32.totalorder %s19, 1
    %p212 = por %p210, %p211
    %p213 = scmp.ne.s32.totalorder %s202, %s203
    %p214 = scmp.eq.s32.totalorder %s19, 0
    %p215 = por %p213, %p214
    %p216 = scmp.ne.s32.totalorder %s202, %s203
    %p217 = scmp.eq.s32.totalorder %s20, 1
    %p218 = por %p216, %p217
    %p220 = scmp.ne.s32.totalorder %s203, %s219
    %p221 = scmp.eq.s32.totalorder %s20, 0
    %p222 = por %p220, %p221
    %p223 = scmp.le.s32.totalorder 1, %s14
    %p224 = scmp.lt.s32.totalorder %s14, 3
    %p225 = pnand %p223, %p224
    %p226 = pneg %p225
    // Predicated region
    $region9: #{attention_block_forward.2} parent=5 // pred_check
      _
    $region10: #{attention_block_forward.2} parent=5 // pred_check_branch
      %228 = sbr.rel (%p225) target = $region12
    $region11: #{attention_block_forward.2} parent=5 // pred_region
      %s229 = ssub.s32 %s14, 1
      // Predicated region
      $region13: #{attention_block_forward.2} parent=11 // pred_check
        %p230 = pneg %p103
      $region14: #{attention_block_forward.2} parent=11 // pred_check_branch
        %232 = sbr.rel (%p230) target = $region16
      $region15: #{attention_block_forward.2} parent=11 // pred_region
        _
      $region16: #{attention_block_forward.2} parent=11 // pred_fallthru
        _
      // Predicated region
      $region17: #{attention_block_forward.2} parent=11 // pred_check
        %p233 = pneg %p124
      $region18: #{attention_block_forward.2} parent=11 // pred_check_branch
        %235 = sbr.rel (%p233) target = $region20
      $region19: #{attention_block_forward.2} parent=11 // pred_region
        _
      $region20: #{attention_block_forward.2} parent=11 // pred_fallthru
        _
      // Predicated region
      $region21: #{attention_block_forward.2} parent=11 // pred_check
        %p236 = pneg %p145
      $region22: #{attention_block_forward.2} parent=11 // pred_check_branch
        %238 = sbr.rel (%p236) target = $region24
      $region23: #{attention_block_forward.2} parent=11 // pred_region
        _
      $region24: #{attention_block_forward.2} parent=11 // pred_fallthru
        _
      // Predicated region
      $region25: #{attention_block_forward.2} parent=11 // pred_check
        %p239 = pneg %p166
      $region26: #{attention_block_forward.2} parent=11 // pred_check_branch
        %241 = sbr.rel (%p239) target = $region28
      $region27: #{attention_block_forward.2} parent=11 // pred_region
        _
      $region28: #{attention_block_forward.2} parent=11 // pred_fallthru
        _
      // Predicated region
      $region29: #{attention_block_forward.2} parent=11 // pred_check
        %p242 = pneg %p187
      $region30: #{attention_block_forward.2} parent=11 // pred_check_branch
        %244 = sbr.rel (%p242) target = $region32
      $region31: #{attention_block_forward.2} parent=11 // pred_region
        _
      $region32: #{attention_block_forward.2} parent=11 // pred_fallthru
        _
    $region12: #{attention_block_forward.2} parent=5 // pred_fallthru
      _
    %p245 = scmp.lt.s32.totalorder %s14, 2
    // Predicated region
    $region33: #{attention_block_forward.2} parent=5 // pred_check
      %p246 = pneg %p245
    $region34: #{attention_block_forward.2} parent=5 // pred_check_branch
      %248 = sbr.rel (%p246) target = $region36
    $region35: #{attention_block_forward.2} parent=5 // pred_region
      // Predicated region
      $region37: #{attention_block_forward.2} parent=35 // pred_check
        %p249 = pneg %p48
      $region38: #{attention_block_forward.2} parent=35 // pred_check_branch
        %251 = sbr.rel (%p249) target = $region40
      $region39: #{attention_block_forward.2} parent=35 // pred_region
        %s252 = smul.u32 2, %s22
        %p253 = scmp.lt.s32.totalorder %s21, 1
        %s254 = scalar_select %p253, %s21, 1
        %p255 = scmp.lt.s32.totalorder %s252, 1
        %s256 = scalar_select %p255, %s252, 1
        %s257 = smul.addr %s254, 2
        %s258 = sadd.s32 %s256, %s257
        %s259 = smul.addr %s258, 4
        %s260 = scalar_lea.vmem %s0, %s259
        %s261 = smul.u32 2, %s22
      $region40: #{attention_block_forward.2} parent=35 // pred_fallthru
        _
      // Predicated region
      $region41: #{attention_block_forward.2} parent=35 // pred_check
        %p262 = pneg %p76
      $region42: #{attention_block_forward.2} parent=35 // pred_check_branch
        %264 = sbr.rel (%p262) target = $region44
      $region43: #{attention_block_forward.2} parent=35 // pred_region
        %s265 = smul.u32 2, %s22
        %p266 = scmp.lt.s32.totalorder %s21, 1
        %s267 = scalar_select %p266, %s21, 1
        %p268 = scmp.lt.s32.totalorder %s265, 1
        %s269 = scalar_select %p268, %s265, 1
        %s270 = smul.addr %s267, 2
        %s271 = sadd.s32 %s269, %s270
        %s272 = smul.addr %s271, 8
        %s273 = scalar_lea.vmem %s1, %s272
        %s274 = smul.u32 2, %s22
      $region44: #{attention_block_forward.2} parent=35 // pred_fallthru
        _
    $region36: #{attention_block_forward.2} parent=5 // pred_fallthru
      _
    %p275 = scmp.le.s32.totalorder 1, %s14
    %p276 = scmp.lt.s32.totalorder %s14, 3
    %p277 = pnand %p275, %p276
    %p278 = pneg %p277
    // Predicated region
    $region45: #{attention_block_forward.2} parent=5 // pred_check
      _
    $region46: #{attention_block_forward.2} parent=5 // pred_check_branch
      %280 = sbr.rel (%p277) target = $region48
    $region47: #{attention_block_forward.2} parent=5 // pred_region
      %s281 = ssub.s32 %s14, 1
      %s282 = smul.u32 2, %s24
      %p283 = scmp.lt.s32.totalorder %s23, 1
      %s284 = scalar_select %p283, %s23, 1
      %p285 = scmp.lt.s32.totalorder %s282, 1
      %s286 = scalar_select %p285, %s282, 1
      %s287 = smul.addr %s284, 2
      %s288 = sadd.s32 %s286, %s287
      %s289 = smul.addr %s288, 4
      %s290 = scalar_lea.vmem %s0, %s289
      %p291 = pneg %p54
      %p292 = pneg %p51
      %s293 = smul.u32 2, %s24
      %p294 = scmp.lt.s32.totalorder %s23, 1
      %s295 = scalar_select %p294, %s23, 1
      %p296 = scmp.lt.s32.totalorder %s293, 1
      %s297 = scalar_select %p296, %s293, 1
      %s298 = smul.addr %s295, 2
      %s299 = sadd.s32 %s297, %s298
      %s300 = smul.addr %s299, 8
      %s301 = scalar_lea.vmem %s1, %s300
      %p302 = pneg %p82
      %p303 = pneg %p79
      %p304 = pneg %p103
      %p305 = pneg %p100
      %p306 = pneg %p124
      %p307 = pneg %p121
      %p308 = pneg %p145
      %p309 = pneg %p142
      %p310 = pneg %p166
      %p311 = pneg %p163
      %p312 = pneg %p187
      %p313 = pneg %p184
      %p314 = pneg %p215
      %p315 = pneg %p212
      %s316 = smul.u32 2, %s24
      %p317 = scmp.lt.s32.totalorder %s23, 1
      %s318 = scalar_select %p317, %s23, 1
      %p319 = scmp.lt.s32.totalorder %s316, 1
      %s320 = scalar_select %p319, %s316, 1
      %s321 = smul.addr %s318, 2
      %s322 = sadd.s32 %s320, %s321
      %s323 = scalar_lea.vmem %s7, %s322
      %s324 = smul.u32 2, %s24
      %p325 = scmp.lt.s32.totalorder %s23, 1
      %s326 = scalar_select %p325, %s23, 1
      %p327 = scmp.lt.s32.totalorder %s324, 1
      %s328 = scalar_select %p327, %s324, 1
      %s329 = smul.addr %s326, 2
      %s330 = sadd.s32 %s328, %s329
      %s331 = smul.addr %s330, 4
      %s332 = scalar_lea.vmem %s0, %s331
      %s333 = smul.u32 2, %s24
      %s334 = smul.u32 2, %s24
      %p335 = scmp.lt.s32.totalorder %s23, 1
      %s336 = scalar_select %p335, %s23, 1
      %p337 = scmp.lt.s32.totalorder %s334, 1
      %s338 = scalar_select %p337, %s334, 1
      %s339 = smul.addr %s336, 2
      %s340 = sadd.s32 %s338, %s339
      %s341 = smul.addr %s340, 8
      %s342 = scalar_lea.vmem %s1, %s341
      %s343 = smul.u32 2, %s24
      %s344 = smul.u32 2, %s24
      %p345 = scmp.lt.s32.totalorder %s23, 1
      %s346 = scalar_select %p345, %s23, 1
      %p347 = scmp.lt.s32.totalorder %s344, 1
      %s348 = scalar_select %p347, %s344, 1
      %s349 = smul.addr %s346, 2
      %s350 = sadd.s32 %s348, %s349
      %s351 = scalar_lea.vmem %s7, %s350
      %s352 = smul.u32 2, %s24
      %v353 = vld [vmem:[%s332] sm:$0xff]
      %v354 = vld [vmem:[%s342] sm:$0x3f]
      %v355 = vld [vmem:[%s342 + $0x8] sm:$0x3f]
      %v356 = vld [vmem:[%s2] sm:$0xff]
      %v357 = vld [vmem:[%s3] sm:$0xff]
      %vm358 = vcmask 48128
      %v360 = vsel %vm358, %v357, 0
      %vm362 = vcmask 1045504
      %v364 = vsel %vm362, %v354, 0
      %v367 = vsel %vm362, %v355, 0
      %369 = vmatprep.subr.mxu0 %v367
      %370 = vmatpush1.msra.mxu0 %v364
      %371 = vmatprep.subr.mxu0 0.0
      %372 = vmatpush1.msra.mxu0 0.0
      %373 = vmatprep.subr.mxu0 0.0
      %374 = vmatpush1.msra.mxu0 0.0
      %375 = vmatprep.subr.mxu0 0.0
      %376 = vmatpush1.msra.mxu0 0.0
      %377 = vmatprep.subr.mxu0 0.0
      %378 = vmatpush1.msra.mxu0 0.0
      %379 = vmatprep.subr.mxu0 0.0
      %380 = vmatpush1.msra.mxu0 0.0
      %381 = vmatprep.subr.mxu0 0.0
      %382 = vmatpush1.msra.mxu0 0.0
      %383 = vmatprep.subr.mxu0 0.0
      %384 = vmatpush1.msra.mxu0 0.0
      %385 = vmatprep.subr.mxu0 0.0
      %386 = vmatpush1.msra.mxu0 0.0
      %387 = vmatprep.subr.mxu0 0.0
      %388 = vmatpush1.msra.mxu0 0.0
      %389 = vmatprep.subr.mxu0 0.0
      %390 = vmatpush1.msra.mxu0 0.0
      %391 = vmatprep.subr.mxu0 0.0
      %392 = vmatpush1.msra.mxu0 0.0
      %393 = vmatprep.subr.mxu0 0.0
      %394 = vmatpush1.msra.mxu0 0.0
      %395 = vmatprep.subr.mxu0 0.0
      %396 = vmatpush1.msra.mxu0 0.0
      %397 = vmatprep.subr.mxu0 0.0
      %398 = vmatpush1.msra.mxu0 0.0
      %399 = vmatprep.subr.mxu0 0.0
      %400 = vmatpush1.msra.mxu0 0.0
      %401 = vmatprep.subr.mxu0 0.0
      %402 = vmatpush1.msra.mxu0 0.0
      %403 = vmatprep.subr.mxu0 0.0
      %404 = vmatpush1.msra.mxu0 0.0
      %405 = vmatprep.subr.mxu0 0.0
      %406 = vmatpush1.msra.mxu0 0.0
      %407 = vmatprep.subr.mxu0 0.0
      %408 = vmatpush1.msra.mxu0 0.0
      %409 = vmatprep.subr.mxu0 0.0
      %410 = vmatpush1.msra.mxu0 0.0
      %411 = vmatprep.subr.mxu0 0.0
      %412 = vmatpush1.msra.mxu0 0.0
      %413 = vmatprep.subr.mxu0 0.0
      %414 = vmatpush1.msra.mxu0 0.0
      %415 = vmatprep.subr.mxu0 0.0
      %416 = vmatpush1.msra.mxu0 0.0
      %417 = vmatprep.subr.mxu0 0.0
      %418 = vmatpush1.msra.mxu0 0.0
      %419 = vmatprep.subr.mxu0 0.0
      %420 = vmatpush1.msra.mxu0 0.0
      %421 = vmatprep.subr.mxu0 0.0
      %422 = vmatpush1.msra.mxu0 0.0
      %423 = vmatprep.subr.mxu0 0.0
      %424 = vmatpush1.msra.mxu0 0.0
      %425 = vmatprep.subr.mxu0 0.0
      %426 = vmatpush1.msra.mxu0 0.0
      %427 = vmatprep.subr.mxu0 0.0
      %428 = vmatpush1.msra.mxu0 0.0
      %429 = vmatprep.subr.mxu0 0.0
      %430 = vmatpush1.msra.mxu0 0.0
      %431 = vmatprep.subr.mxu0 0.0
      %432 = vmatpush1.msra.mxu0 0.0
      %433 = vmatprep.mubr.f32.mxu0 0.0
      %434 = vmatmul.mubr.f32.gmra.mrb[0].mxu0 %v360
      %v435 = vpop.f32.mrb[0].mxu0
      %v436 = vadd.f32 0.0, %v435
      %v437 = vpop.f32.mrb[0].mxu0
      %v438 = vadd.f32 0.0, %v437
      %439 = vdwg.mxu0
      %v441 = vcombine.high %v353, %v353
      %vm442 = vcmask 31744
      %v444 = vsel %vm442, %v356, 0
      %vm446 = vcmask 1043456
      %v447 = vsel %vm446, %v353, 0
      %v449 = vsel %vm446, %v441, 0
      %451 = vmatprep.subr.mxu0 %v449
      %452 = vmatpush1.msra.mxu0 %v447
      %453 = vmatprep.subr.mxu0 0.0
      %454 = vmatpush1.msra.mxu0 0.0
      %455 = vmatprep.subr.mxu0 0.0
      %456 = vmatpush1.msra.mxu0 0.0
      %457 = vmatprep.subr.mxu0 0.0
      %458 = vmatpush1.msra.mxu0 0.0
      %459 = vmatprep.subr.mxu0 0.0
      %460 = vmatpush1.msra.mxu0 0.0
      %461 = vmatprep.subr.mxu0 0.0
      %462 = vmatpush1.msra.mxu0 0.0
      %463 = vmatprep.subr.mxu0 0.0
      %464 = vmatpush1.msra.mxu0 0.0
      %465 = vmatprep.subr.mxu0 0.0
      %466 = vmatpush1.msra.mxu0 0.0
      %467 = vmatprep.subr.mxu0 0.0
      %468 = vmatpush1.msra.mxu0 0.0
      %469 = vmatprep.subr.mxu0 0.0
      %470 = vmatpush1.msra.mxu0 0.0
      %471 = vmatprep.subr.mxu0 0.0
      %472 = vmatpush1.msra.mxu0 0.0
      %473 = vmatprep.subr.mxu0 0.0
      %474 = vmatpush1.msra.mxu0 0.0
      %475 = vmatprep.subr.mxu0 0.0
      %476 = vmatpush1.msra.mxu0 0.0
      %477 = vmatprep.subr.mxu0 0.0
      %478 = vmatpush1.msra.mxu0 0.0
      %479 = vmatprep.subr.mxu0 0.0
      %480 = vmatpush1.msra.mxu0 0.0
      %481 = vmatprep.subr.mxu0 0.0
      %482 = vmatpush1.msra.mxu0 0.0
      %483 = vmatprep.subr.mxu0 0.0
      %484 = vmatpush1.msra.mxu0 0.0
      %485 = vmatprep.subr.mxu0 0.0
      %486 = vmatpush1.msra.mxu0 0.0
      %487 = vmatprep.subr.mxu0 0.0
      %488 = vmatpush1.msra.mxu0 0.0
      %489 = vmatprep.subr.mxu0 0.0
      %490 = vmatpush1.msra.mxu0 0.0
      %491 = vmatprep.subr.mxu0 0.0
      %492 = vmatpush1.msra.mxu0 0.0
      %493 = vmatprep.subr.mxu0 0.0
      %494 = vmatpush1.msra.mxu0 0.0
      %495 = vmatprep.subr.mxu0 0.0
      %496 = vmatpush1.msra.mxu0 0.0
      %497 = vmatprep.subr.mxu0 0.0
      %498 = vmatpush1.msra.mxu0 0.0
      %499 = vmatprep.subr.mxu0 0.0
      %500 = vmatpush1.msra.mxu0 0.0
      %501 = vmatprep.subr.mxu0 0.0
      %502 = vmatpush1.msra.mxu0 0.0
      %503 = vmatprep.subr.mxu0 0.0
      %504 = vmatpush1.msra.mxu0 0.0
      %505 = vmatprep.subr.mxu0 0.0
      %506 = vmatpush1.msra.mxu0 0.0
      %507 = vmatprep.subr.mxu0 0.0
      %508 = vmatpush1.msra.mxu0 0.0
      %509 = vmatprep.subr.mxu0 0.0
      %510 = vmatpush1.msra.mxu0 0.0
      %511 = vmatprep.subr.mxu0 0.0
      %512 = vmatpush1.msra.mxu0 0.0
      %513 = vmatprep.subr.mxu0 0.0
      %514 = vmatpush1.msra.mxu0 0.0
      %515 = vmatprep.mubr.f32.mxu0 0.0
      %516 = vmatmul.mubr.f32.gmra.mrb[0].mxu0 %v444
      %v517 = vpop.f32.mrb[0].mxu0
      %v518 = vadd.f32 %v436, %v517
      %v519 = vpop.f32.mrb[0].mxu0
      %v520 = vadd.f32 %v438, %v519
      %521 = vdwg.mxu0
      %v522 = vld [vmem:[%s4] sm:$0xff]
      %524 = vset.pattern.permute.xlu0 0
      %525 = vperm.xlu0 %524, %v522
      %v526 = vpop.permute.xlu0 %525
      %v528 = vadd.f32 %v518, %v526
      %v529 = vadd.f32 %v520, %v526
      %v530 = vmax.f32 %v528, 0.0
      %v531 = vmax.f32 %v529, 0.0
      %v532 = vld [vmem:[%s5] sm:$0xff]
      %534 = vset.pattern.permute.xlu0 0
      %535 = vperm.xlu0 %534, %v532
      %v536 = vpop.permute.xlu0 %535
      %v538 = vmul.f32 %v530, %v536
      %v539 = vmul.f32 %v531, %v536
      %v540 = vrot.slane %v538, 4
      %v541 = vadd.f32 %v538, %v540
      %v542 = vrot.slane %v541, 2
      %v543 = vadd.f32 %v541, %v542
      %v544 = vrot.slane %v543, 1
      %v545 = vadd.f32 %v543, %v544
      %v546 = vrot.slane %v539, 4
      %v547 = vadd.f32 %v539, %v546
      %v548 = vrot.slane %v547, 2
      %v549 = vadd.f32 %v547, %v548
      %v550 = vrot.slane %v549, 1
      %v551 = vadd.f32 %v549, %v550
      %s552 = sld [smem:[#allocation2]]
      %v553 = vstv %s552
      %v554 = vadd.f32 %v545, %v553
      %v555 = vadd.f32 %v551, %v553
      %v558 = vcombine.low %v554, %v555
      %v560 = vunpack.c.l.s4 1966171168
      %v561 = vunpack.c.0.s8 %v560
      %v562 = vlaneseq
      %v563 = vshrl.u32 %v562, 7
      %v564 = vsub.s32 %v561, %v563
      %v565 = vrot.slane %v558, %v564
      %v567 = vunpack.c.l.s4 1966171168
      %v568 = vunpack.c.0.s8 %v567
      %v569 = vlaneseq
      %v570 = vshrl.u32 %v569, 7
      %v571 = vsub.s32 %v568, %v570
      %v572 = vrot.slane %v565, %v571
      %v574 = vlaneseq
      %vm575 = vcmp.ge.s32.totalorder %v574, 0
      %vm576 = vcmp.lt.s32.totalorder %v574, 256
      %vm577 = vmand %vm575, %vm576
      %578 = vst.msk [vmem:[%s351] sm:$0x3] %vm577, %v572
      %s579 = smul.u32 2, %s24
      %p580 = scmp.lt.s32.totalorder %s23, 1
      %s581 = scalar_select %p580, %s23, 1
      %p582 = scmp.lt.s32.totalorder %s579, 1
      %s583 = scalar_select %p582, %s579, 1
      %s584 = smul.addr %s581, 2
      %s585 = sadd.s32 %s583, %s584
      %s586 = scalar_lea.vmem %s7, %s585
      // Predicated region
      $region49: #{attention_block_forward.2} parent=47 // pred_check
        %p587 = pneg %p212
      $region50: #{attention_block_forward.2} parent=47 // pred_check_branch
        %589 = sbr.rel (%p587) target = $region52
      $region51: #{attention_block_forward.2} parent=47 // pred_region
        %s590 = smul.u32 2, %s24
      $region52: #{attention_block_forward.2} parent=47 // pred_fallthru
        _
    $region48: #{attention_block_forward.2} parent=5 // pred_fallthru
      _
    %p591 = scmp.le.s32.totalorder 2, %s14
    // Predicated region
    $region53: #{attention_block_forward.2} parent=5 // pred_check
      %p592 = pneg %p591
    $region54: #{attention_block_forward.2} parent=5 // pred_check_branch
      %594 = sbr.rel (%p592) target = $region56
    $region55: #{attention_block_forward.2} parent=5 // pred_region
      %s595 = ssub.s32 %s14, 2
      // Predicated region
      $region57: #{attention_block_forward.2} parent=55 // pred_check
        %p596 = pneg %p218
      $region58: #{attention_block_forward.2} parent=55 // pred_check_branch
        %598 = sbr.rel (%p596) target = $region60
      $region59: #{attention_block_forward.2} parent=55 // pred_region
        %s599 = smul.u32 2, %s26
        %p600 = scmp.lt.s32.totalorder %s25, 1
        %s601 = scalar_select %p600, %s25, 1
        %p602 = scmp.lt.s32.totalorder %s599, 1
        %s603 = scalar_select %p602, %s599, 1
        %s604 = smul.addr %s601, 2
        %s605 = sadd.s32 %s603, %s604
        %s606 = scalar_lea.vmem %s7, %s605
      $region60: #{attention_block_forward.2} parent=55 // pred_fallthru
        _
    $region56: #{attention_block_forward.2} parent=5 // pred_fallthru
      _
  $region6: #{attention_block_forward.2} parent=0 // loop_footer
    %s18 = sadd.s32 1, %s14
  $region7: #{attention_block_forward.2} parent=0 // loop_footer_branch
    %13 = sbr.rel target = $region3
  $region8: #{attention_block_forward.2} parent=0 // loop_exit
    _

</llo_original>
